<compile_context>
chip_gen: v6e
topology: v6e:2x2x1
jax: 0.10.0
libtpu: 0.0.40
codegen_flags: <defaults>
</compile_context>

<pallas_src>
import functools

import jax
import jax.numpy as jnp
from jax import lax
from jax.experimental import pallas as pl
from jax.experimental.pallas import tpu as pltpu

EPS = 1e-8
ENTROPY_WEIGHT = 2.0


def _round_up(x, m):
    return ((x + m - 1) // m) * m


def _cdiv(a, b):
    return -(-a // b)


def _scan_loss_kernel(anch_ref, neigh_ref, col_ref, cons_ref, *, b_total, has_pad):
    c = pl.program_id(0)              # batch shard (parallel across TensorCores)
    t = pl.program_id(1)              # batch tile within the shard (reduction)

    @pl.when(t == 0)
    def _init():
        col_ref[...] = jnp.zeros_like(col_ref)
        cons_ref[...] = jnp.zeros_like(cons_ref)

    a = anch_ref[...].astype(jnp.float32)    # [TB, N] anchor logits
    p = neigh_ref[...].astype(jnp.float32)   # [TB, N] neighbor logits
    tb, n = a.shape

    # Row softmax statistics (neighbors never need explicit normalization).
    a_max = jnp.max(a, axis=1, keepdims=True)
    a_exp = jnp.exp(a - a_max)
    a_sum = jnp.sum(a_exp, axis=1, keepdims=True)            # [TB, 1]

    p_max = jnp.max(p, axis=1, keepdims=True)
    p_exp = jnp.exp(p - p_max)
    p_sum = jnp.sum(p_exp, axis=1, keepdims=True)             # [TB, 1]

    cross = jnp.sum(a_exp * p_exp, axis=1, keepdims=True)      # [TB, 1]

    # Single fused log: log(sim) = log(<softmax(a), softmax(p)>)
    #                            = log(cross / (a_sum * p_sum)).
    log_sim = jnp.log(cross / (a_sum * p_sum))
    log_sim = jnp.maximum(log_sim, -100.0)   # PyTorch BCELoss clamps log at -100
    neg_log = -log_sim                                        # [TB, 1]

    inv_a_sum = 1.0 / a_sum                                   # [TB, 1]
    if has_pad:
        # Mask zero-padded rows; folded into the per-row scale so it costs no
        # extra [TB, N] multiply.
        tile_idx = c * pl.num_programs(1) + t
        row_ids = tile_idx * tb + lax.broadcasted_iota(jnp.int32, (tb, 1), 0)
        mask = (row_ids < b_total).astype(jnp.float32)         # [TB, 1]
        inv_a_sum = inv_a_sum * mask
        neg_log = neg_log * mask

    a_prob = a_exp * inv_a_sum                                 # [TB, N]

    # Deferred sublane reduce: fold [TB, .] into 8-row groups with pure vreg
    # (VPU) adds; the final 8->1 reduce happens in the wrapper.
    g = tb // 8
    col_ref[...] += jnp.sum(a_prob.reshape(g, 8, n), axis=0)   # (8, N)
    cons_ref[...] += jnp.sum(neg_log.reshape(g, 8, 1), axis=0)  # (8, 1)


def scan_loss(anchors, neighbors, *, entropy_weight=ENTROPY_WEIGHT,
              block_rows=None, num_shards=None):
    """anchors, neighbors: [B, N] logits (f32 or bf16)
    -> (total_loss, consistency_loss, entropy_loss) f32 scalars."""
    assert anchors.shape == neighbors.shape and anchors.ndim == 2
    b, n = anchors.shape

    itemsize = jnp.dtype(anchors.dtype).itemsize
    # Sublane packing of the input dtype (8 rows/vreg for f32, 16 for bf16, 32 for i8).
    sub = 8 if itemsize >= 4 else (16 if itemsize == 2 else 32)
    lane_n = _round_up(n, 128)                 # lanes are padded to 128 in VMEM
    n_f32_tmp = 4 if itemsize >= 4 else 6      # f32 temporaries (+casts for bf16)

    # Batch shards across TensorCores (v7x has 2 TCs; harmless elsewhere).
    if num_shards is None:
        num_shards = 2 if b >= 1024 else 1
    per_shard = _cdiv(b, num_shards)

    if block_rows is None:
        # Per-step footprint: 2 inputs x 2 pipeline buffers + f32 temporaries.
        per_row_bytes = 4 * lane_n * itemsize + n_f32_tmp * lane_n * 4
        budget = 24 * 1024 * 1024
        tb = max(sub, min(8192, (budget // per_row_bytes) // sub * sub))
    else:
        tb = max(sub, _round_up(block_rows, sub))
    tb = min(tb, _round_up(per_shard, sub))

    tiles_per_shard = _cdiv(per_shard, tb)
    b_pad = num_shards * tiles_per_shard * tb
    if b_pad != b:
        pad = b_pad - b
        anchors = jnp.pad(anchors, ((0, pad), (0, 0)))
        neighbors = jnp.pad(neighbors, ((0, pad), (0, 0)))

    # Explicit scoped-VMEM limit from the (lane-padded) footprint estimate, with
    # headroom; stays within v7x's 64 MiB physical VMEM.
    est_bytes = (4 * itemsize + n_f32_tmp * 4) * tb * lane_n + (1 << 20)
    vmem_limit = int(min(max(est_bytes + (8 << 20), 32 << 20), 56 << 20))

    kernel = functools.partial(_scan_loss_kernel, b_total=b, has_pad=(b_pad != b))

    col_part, cons_part = pl.pallas_call(
        kernel,
        out_shape=(
            jax.ShapeDtypeStruct((num_shards, 8, n), jnp.float32),  # col sums
            jax.ShapeDtypeStruct((num_shards, 8, 1), jnp.float32),  # -log(sim) sums
        ),
        grid_spec=pltpu.PrefetchScalarGridSpec(
            num_scalar_prefetch=0,
            grid=(num_shards, tiles_per_shard),
            in_specs=[
                pl.BlockSpec((tb, n), lambda c, t: (c * tiles_per_shard + t, 0)),
                pl.BlockSpec((tb, n), lambda c, t: (c * tiles_per_shard + t, 0)),
            ],
            out_specs=[
                pl.BlockSpec((None, 8, n), lambda c, t: (c, 0, 0)),
                pl.BlockSpec((None, 8, 1), lambda c, t: (c, 0, 0)),
            ],
        ),
        compiler_params=pltpu.CompilerParams(
            dimension_semantics=("parallel", "arbitrary"),
            vmem_limit_bytes=vmem_limit,
        ),
    )(anchors, neighbors)

    # Tiny O(N) epilogue in plain JAX: combine per-shard partials, entropy, totals.
    inv_b = jnp.float32(1.0 / b)
    consistency = jnp.sum(cons_part) * inv_b                  # BCE(sim, ones)
    mean_prob = jnp.sum(col_part, axis=(0, 1)) * inv_b        # mean anchors_prob
    mp = jnp.maximum(mean_prob, EPS)
    entropy = -jnp.sum(mp * jnp.log(mp))                      # 1-D Entropy branch
    total = consistency - jnp.float32(entropy_weight) * entropy
    return total, consistency, entropy


def _scan_loss_ref(anchors, neighbors, entropy_weight=ENTROPY_WEIGHT):
    a_prob = jax.nn.softmax(anchors.astype(jnp.float32), axis=1)
    p_prob = jax.nn.softmax(neighbors.astype(jnp.float32), axis=1)
    sim = jnp.sum(a_prob * p_prob, axis=1)
    consistency = -jnp.mean(jnp.maximum(jnp.log(sim), -100.0))
    mp = jnp.maximum(jnp.mean(a_prob, axis=0), EPS)
    entropy = -jnp.sum(mp * jnp.log(mp))
    total = consistency - entropy_weight * entropy
    return total, consistency, entropy


def _check(got, want, atol=2e-5, rtol=1e-5):
    for g, w in zip(got, want):
        assert jnp.allclose(g, w, atol=atol, rtol=rtol), (g, w)


if __name__ == "__main__":
    key = jax.random.PRNGKey(0)
    k1, k2, k3, k4, k5, k6, k7, k8 = jax.random.split(key, 8)

    # 1) Demo shape implied by the module: B anchor/neighbor pairs, N cluster logits.
    B, N = 8, 32
    anchors = jax.random.normal(k1, (B, N), dtype=jnp.float32)
    neighbors = jax.random.normal(k2, (B, N), dtype=jnp.float32)
    out = scan_loss(anchors, neighbors)
    jax.block_until_ready(out)
    _check(out, _scan_loss_ref(anchors, neighbors))

    # 2) Non-multiple batch + forced small tile: multi-tile accumulator + pad mask.
    B2, N2 = 20, 10
    a2 = jax.random.normal(k3, (B2, N2), dtype=jnp.float32)
    n2 = jax.random.normal(k4, (B2, N2), dtype=jnp.float32)
    out2 = scan_loss(a2, n2, block_rows=8)
    jax.block_until_ready(out2)
    _check(out2, _scan_loss_ref(a2, n2))

    # 3) Forced 2-shard ("parallel" leading axis) path with padding.
    B3, N3 = 40, 48
    a3 = jax.random.normal(k5, (B3, N3), dtype=jnp.float32)
    n3 = jax.random.normal(k6, (B3, N3), dtype=jnp.float32)
    out3 = scan_loss(a3, n3, block_rows=8, num_shards=2)
    jax.block_until_ready(out3)
    _check(out3, _scan_loss_ref(a3, n3))

    # 4) bf16 inputs: tile rows round up to the 16-row sublane pack.
    B4, N4 = 20, 16
    a4 = jax.random.normal(k7, (B4, N4), dtype=jnp.float32).astype(jnp.bfloat16)
    n4 = jax.random.normal(k8, (B4, N4), dtype=jnp.float32).astype(jnp.bfloat16)
    out4 = scan_loss(a4, n4, block_rows=8)
    jax.block_until_ready(out4)
    _check(out4, _scan_loss_ref(a4, n4))

    print("KERNEL_OK")
</pallas_src>

<mosaic_0001>
module attributes {stable_mosaic.version = 11 : i64} {
  func.func @_scan_loss_kernel(%arg0: i32, %arg1: i32, %arg2: memref<8x32xf32, #tpu.memory_space<vmem>>, %arg3: memref<8x32xf32, #tpu.memory_space<vmem>>, %arg4: memref<1x8x32xf32, #tpu.memory_space<vmem>>, %arg5: memref<1x8x1xf32, #tpu.memory_space<vmem>>) attributes {dimension_semantics = [#tpu.dimension_semantics<parallel>, #tpu.dimension_semantics<arbitrary>], iteration_bounds = array<i64: 1, 1>, scalar_prefetch = 0 : i64, scratch_operands = 0 : i64, tpu.core_type = #tpu.core_type<tc>, window_params = [{transform_indices = @transform_0, window_bounds = array<i64: 8, 32>}, {transform_indices = @transform_1, window_bounds = array<i64: 8, 32>}, {transform_indices = @transform_2, window_bounds = array<i64: 1, 8, 32>}, {transform_indices = @transform_3, window_bounds = array<i64: 1, 8, 1>}]} {
    %c0_i32 = arith.constant 0 : i32
    %0 = arith.cmpi eq, %arg1, %c0_i32 : i32
    %1 = arith.extui %0 : i1 to i32
    %c0_i32_0 = arith.constant 0 : i32
    %2 = arith.cmpi ne, %1, %c0_i32_0 : i32
    scf.if %2 {
      %cst_25 = arith.constant 0.000000e+00 : f32
      %49 = vector.broadcast %cst_25 : f32 to vector<8x32xf32>
      %c0_26 = arith.constant 0 : index
      %c0_27 = arith.constant 0 : index
      %c0_28 = arith.constant 0 : index
      %50 = vector.load %arg4[%c0_26, %c0_27, %c0_28] : memref<1x8x32xf32, #tpu.memory_space<vmem>>, vector<1x8x32xf32>
      %51 = vector.shape_cast %50 : vector<1x8x32xf32> to vector<8x32xf32>
      %52 = vector.shape_cast %49 : vector<8x32xf32> to vector<1x8x32xf32>
      tpu.vector_store %arg4[%c0_26, %c0_27, %c0_28], %52 {strides = array<i32>} : memref<1x8x32xf32, #tpu.memory_space<vmem>>, vector<1x8x32xf32>,
      %cst_29 = arith.constant 0.000000e+00 : f32
      %53 = vector.broadcast %cst_29 : f32 to vector<8x1xf32>
      %c0_30 = arith.constant 0 : index
      %c0_31 = arith.constant 0 : index
      %c0_32 = arith.constant 0 : index
      %54 = vector.load %arg5[%c0_30, %c0_31, %c0_32] : memref<1x8x1xf32, #tpu.memory_space<vmem>>, vector<1x8x1xf32>
      %55 = vector.shape_cast %54 : vector<1x8x1xf32> to vector<8x1xf32>
      %56 = vector.shape_cast %53 : vector<8x1xf32> to vector<1x8x1xf32>
      tpu.vector_store %arg5[%c0_30, %c0_31, %c0_32], %56 {strides = array<i32>} : memref<1x8x1xf32, #tpu.memory_space<vmem>>, vector<1x8x1xf32>,
    } else {
    }
    %c0 = arith.constant 0 : index
    %c0_1 = arith.constant 0 : index
    %3 = vector.load %arg2[%c0, %c0_1] : memref<8x32xf32, #tpu.memory_space<vmem>>, vector<8x32xf32>
    %c0_2 = arith.constant 0 : index
    %c0_3 = arith.constant 0 : index
    %4 = vector.load %arg3[%c0_2, %c0_3] : memref<8x32xf32, #tpu.memory_space<vmem>>, vector<8x32xf32>
    %cst = arith.constant dense<0xFF800000> : vector<8xf32>
    %5 = vector.multi_reduction <maximumf>, %3, %cst [1] : vector<8x32xf32> to vector<8xf32>
    %6 = vector.shape_cast %5 : vector<8xf32> to vector<8x1xf32>
    %7 = vector.broadcast %6 : vector<8x1xf32> to vector<8x32xf32>
    %8 = arith.subf %3, %7 : vector<8x32xf32>
    %9 = math.exp %8 : vector<8x32xf32>
    %cst_4 = arith.constant dense<0.000000e+00> : vector<8xf32>
    %10 = vector.multi_reduction <add>, %9, %cst_4 [1] : vector<8x32xf32> to vector<8xf32>
    %11 = vector.shape_cast %10 : vector<8xf32> to vector<8x1xf32>
    %cst_5 = arith.constant dense<0xFF800000> : vector<8xf32>
    %12 = vector.multi_reduction <maximumf>, %4, %cst_5 [1] : vector<8x32xf32> to vector<8xf32>
    %13 = vector.shape_cast %12 : vector<8xf32> to vector<8x1xf32>
    %14 = vector.broadcast %13 : vector<8x1xf32> to vector<8x32xf32>
    %15 = arith.subf %4, %14 : vector<8x32xf32>
    %16 = math.exp %15 : vector<8x32xf32>
    %cst_6 = arith.constant dense<0.000000e+00> : vector<8xf32>
    %17 = vector.multi_reduction <add>, %16, %cst_6 [1] : vector<8x32xf32> to vector<8xf32>
    %18 = vector.shape_cast %17 : vector<8xf32> to vector<8x1xf32>
    %19 = arith.mulf %9, %16 : vector<8x32xf32>
    %cst_7 = arith.constant dense<0.000000e+00> : vector<8xf32>
    %20 = vector.multi_reduction <add>, %19, %cst_7 [1] : vector<8x32xf32> to vector<8xf32>
    %21 = vector.shape_cast %20 : vector<8xf32> to vector<8x1xf32>
    %22 = arith.mulf %11, %18 : vector<8x1xf32>
    %23 = arith.divf %21, %22 : vector<8x1xf32>
    %24 = math.log %23 : vector<8x1xf32>
    %cst_8 = arith.constant -1.000000e+02 : f32
    %25 = vector.broadcast %cst_8 : f32 to vector<8x1xf32>
    %26 = arith.maximumf %24, %25 : vector<8x1xf32>
    %cst_9 = arith.constant 0.000000e+00 : f32
    %27 = vector.broadcast %cst_9 : f32 to vector<8x1xf32>
    %28 = arith.subf %27, %26 : vector<8x1xf32>
    %cst_10 = arith.constant 1.000000e+00 : f32
    %29 = vector.broadcast %cst_10 : f32 to vector<8x1xf32>
    %30 = arith.divf %29, %11 : vector<8x1xf32>
    %31 = vector.broadcast %30 : vector<8x1xf32> to vector<8x32xf32>
    %32 = arith.mulf %9, %31 : vector<8x32xf32>
    %c0_11 = arith.constant 0 : index
    %c0_12 = arith.constant 0 : index
    %c0_13 = arith.constant 0 : index
    %33 = vector.load %arg4[%c0_11, %c0_12, %c0_13] : memref<1x8x32xf32, #tpu.memory_space<vmem>>, vector<1x8x32xf32>
    %34 = vector.shape_cast %33 : vector<1x8x32xf32> to vector<8x32xf32>
    %35 = vector.shape_cast %32 : vector<8x32xf32> to vector<1x8x32xf32>
    %cst_14 = arith.constant dense<0.000000e+00> : vector<8x32xf32>
    %36 = vector.multi_reduction <add>, %35, %cst_14 [0] : vector<1x8x32xf32> to vector<8x32xf32>
    %37 = arith.addf %34, %36 : vector<8x32xf32>
    %c0_15 = arith.constant 0 : index
    %c0_16 = arith.constant 0 : index
    %c0_17 = arith.constant 0 : index
    %38 = vector.load %arg4[%c0_15, %c0_16, %c0_17] : memref<1x8x32xf32, #tpu.memory_space<vmem>>, vector<1x8x32xf32>
    %39 = vector.shape_cast %38 : vector<1x8x32xf32> to vector<8x32xf32>
    %40 = vector.shape_cast %37 : vector<8x32xf32> to vector<1x8x32xf32>
    tpu.vector_store %arg4[%c0_15, %c0_16, %c0_17], %40 {strides = array<i32>} : memref<1x8x32xf32, #tpu.memory_space<vmem>>, vector<1x8x32xf32>,
    %c0_18 = arith.constant 0 : index
    %c0_19 = arith.constant 0 : index
    %c0_20 = arith.constant 0 : index
    %41 = vector.load %arg5[%c0_18, %c0_19, %c0_20] : memref<1x8x1xf32, #tpu.memory_space<vmem>>, vector<1x8x1xf32>
    %42 = vector.shape_cast %41 : vector<1x8x1xf32> to vector<8x1xf32>
    %43 = vector.shape_cast %28 : vector<8x1xf32> to vector<1x8x1xf32>
    %cst_21 = arith.constant dense<0.000000e+00> : vector<8x1xf32>
    %44 = vector.multi_reduction <add>, %43, %cst_21 [0] : vector<1x8x1xf32> to vector<8x1xf32>
    %45 = arith.addf %42, %44 : vector<8x1xf32>
    %c0_22 = arith.constant 0 : index
    %c0_23 = arith.constant 0 : index
    %c0_24 = arith.constant 0 : index
    %46 = vector.load %arg5[%c0_22, %c0_23, %c0_24] : memref<1x8x1xf32, #tpu.memory_space<vmem>>, vector<1x8x1xf32>
    %47 = vector.shape_cast %46 : vector<1x8x1xf32> to vector<8x1xf32>
    %48 = vector.shape_cast %45 : vector<8x1xf32> to vector<1x8x1xf32>
    tpu.vector_store %arg5[%c0_22, %c0_23, %c0_24], %48 {strides = array<i32>} : memref<1x8x1xf32, #tpu.memory_space<vmem>>, vector<1x8x1xf32>,
    return
  }
  func.func @transform_0(%arg0: i32, %arg1: i32) -> (i32, i32) {
    %c1_i32 = arith.constant 1 : i32
    %0 = arith.muli %arg0, %c1_i32 : i32
    %1 = arith.addi %0, %arg1 : i32
    %c0_i32 = arith.constant 0 : i32
    %c0_i32_0 = arith.constant 0 : i32
    return %1, %c0_i32 : i32, i32
  }
  func.func @transform_1(%arg0: i32, %arg1: i32) -> (i32, i32) {
    %c1_i32 = arith.constant 1 : i32
    %0 = arith.muli %arg0, %c1_i32 : i32
    %1 = arith.addi %0, %arg1 : i32
    %c0_i32 = arith.constant 0 : i32
    %c0_i32_0 = arith.constant 0 : i32
    return %1, %c0_i32 : i32, i32
  }
  func.func @transform_2(%arg0: i32, %arg1: i32) -> (i32, i32, i32) {
    %c0_i32 = arith.constant 0 : i32
    %c0_i32_0 = arith.constant 0 : i32
    %c0_i32_1 = arith.constant 0 : i32
    return %arg0, %c0_i32, %c0_i32_0 : i32, i32, i32
  }
  func.func @transform_3(%arg0: i32, %arg1: i32) -> (i32, i32, i32) {
    %c0_i32 = arith.constant 0 : i32
    %c0_i32_0 = arith.constant 0 : i32
    %c0_i32_1 = arith.constant 0 : i32
    return %arg0, %c0_i32, %c0_i32_0 : i32, i32, i32
  }
}

</mosaic_0001>

<llo_original>
// kernel: tpu_custom_call.1
$region0: #{tpu_custom_call.1}
  #allocation0 [shape = 'u32[]', space=smem, size = 0x4, offset = 0x4, fixed_abs, tag = 'smem constant byte address 0x4 - core index']
  #allocation1 [shape = 'u32[144,128]{1,0:T(1,128)}', space=vmem, size = 0x12000, scoped, tag = 'internal scratch']
  %s0 = inlined_call_operand.hbm [shape: f32[8,32], index: 0, kind: input, shape index: {}]
  %s1 = inlined_call_operand.hbm [shape: f32[8,32], index: 1, kind: input, shape index: {}]
  %s2 = inlined_call_operand.hbm [shape: f32[1,8,32], index: 2, kind: output, shape index: {0}]
  %s3 = inlined_call_operand.vmem [shape: f32[1,8,1], index: 3, kind: output, shape index: {1}]
  %4 = xla_tuple %s2, %s3
  %s5 = sld [smem:[#allocation0]]
  $region38: #{tpu_custom_call.1} parent=0
    _
  %s7 = ssub.s32 1, %s5
  %s8 = scalar_select 0, %s7, %s5
  $region1: #{tpu_custom_call.1} parent=0
    #allocation2 [shape = 'u8[4096]{0}', space=vmem, size = 0x1000, scoped, tag = 'input window, operand 0, single buffered']
    #allocation3 [shape = 's32[1]{0}', space=sflag, size = 0x4, scoped, tag = 'scoped memory for tpu_custom_call.1']
    #allocation4 [shape = 's32[1]{0}', space=sflag, size = 0x4, scoped, tag = 'scoped memory for tpu_custom_call.1']
    #allocation5 [shape = 'u8[4096]{0}', space=vmem, size = 0x1000, scoped, tag = 'input window, operand 1, single buffered']
    #allocation6 [shape = 's32[1]{0}', space=sflag, size = 0x4, scoped, tag = 'scoped memory for tpu_custom_call.1']
    #allocation7 [shape = 'u8[4096]{0}', space=vmem, size = 0x1000, scoped, tag = 'output window, operand 0, single buffered']
    %9 = vsyncpa [#allocation3], 0
    %10 = vsyncpa [#allocation6], 0
    %11 = vsyncpa [#allocation4], 0
    // Predicated region
    $region2: #{tpu_custom_call.1} parent=1 // pred_check
      _
    $region3: #{tpu_custom_call.1} parent=1 // pred_check_branch
      %13 = sbr.rel (0) target = $region5
    $region4: #{tpu_custom_call.1} parent=1 // pred_region
      %s14 = sadd.s32 0, 0
      %s16 = ssub.s32 128, 128
      %17 = vsyncadd [#allocation3], %s16
      %s18 = smul.addr %s14, 128
      %s19 = scalar_lea.hbm %s0, %s18
      %s21 = sshll.u32 [#allocation2], 4
      %s22 = int_to_ptr.vmem [resolvable:$true] %s21
      %24 = dma.hbm_to_vmem [thread:$0]  %s19, 128, %s22, [#allocation3]
    $region5: #{tpu_custom_call.1} parent=1 // pred_fallthru
      _
    // Predicated region
    $region6: #{tpu_custom_call.1} parent=1 // pred_check
      _
    $region7: #{tpu_custom_call.1} parent=1 // pred_check_branch
      %26 = sbr.rel (0) target = $region9
    $region8: #{tpu_custom_call.1} parent=1 // pred_region
      %s27 = sadd.s32 0, 0
      %s29 = ssub.s32 128, 128
      %30 = vsyncadd [#allocation6], %s29
      %s31 = smul.addr %s27, 128
      %s32 = scalar_lea.hbm %s1, %s31
      %s34 = sshll.u32 [#allocation5], 4
      %s35 = int_to_ptr.vmem [resolvable:$true] %s34
      %37 = dma.hbm_to_vmem [thread:$0]  %s32, 128, %s35, [#allocation6]
    $region9: #{tpu_custom_call.1} parent=1 // pred_fallthru
      _
    // Predicated region
    $region10: #{tpu_custom_call.1} parent=1 // pred_check
      _
    $region11: #{tpu_custom_call.1} parent=1 // pred_check_branch
      %39 = sbr.rel (0) target = $region13
    $region12: #{tpu_custom_call.1} parent=1 // pred_region
      %40 = dma.done [#allocation3], 128
    $region13: #{tpu_custom_call.1} parent=1 // pred_fallthru
      _
    // Predicated region
    $region14: #{tpu_custom_call.1} parent=1 // pred_check
      _
    $region15: #{tpu_custom_call.1} parent=1 // pred_check_branch
      %42 = sbr.rel (0) target = $region17
    $region16: #{tpu_custom_call.1} parent=1 // pred_region
      %43 = dma.done [#allocation6], 128
    $region17: #{tpu_custom_call.1} parent=1 // pred_fallthru
      _
    %s44 = sadd.s32 0, 0
    %s45 = sadd.s32 0, 0
    %p46 = scmp.eq.s32.totalorder 0, 0
    // Predicated region
    $region18: #{tpu_custom_call.1} parent=1 // pred_check
      %p47 = pneg %p46
    $region19: #{tpu_custom_call.1} parent=1 // pred_check_branch
      %49 = sbr.rel (%p47) target = $region21
    $region20: #{tpu_custom_call.1} parent=1 // pred_region
      %vm50 = vcmask 261120
      %51 = vst.msk [vmem:[#allocation7] sm:$0xff] %vm50, 0.0
      %vm52 = vcmask 7168
      %53 = vst.msk [vmem:[%s3] sm:$0xff] %vm52, 0.0
    $region21: #{tpu_custom_call.1} parent=1 // pred_fallthru
      _
    %v54 = vld [vmem:[#allocation2] sm:$0xff]
    %v55 = vld [vmem:[#allocation5] sm:$0xff]
    %vm56 = vcmask 261120
    %v57 = vsel %vm56, %v54, -inf
    %58 = vmax.xlane.f32.xlu0 %v57
    %v59 = vpop.xlane.xlu0 %58
    %v60 = vsub.f32 %v54, %v59
    %v61 = vmul.f32 %v60, 1.442695
    %v62 = vpow.pop %v61
    %v63 = vsel %vm56, %v62, 0.0
    %64 = vadd.xlane.f32.xlu0 %v63
    %v65 = vpop.xlane.xlu0 %64
    %v66 = vsel %vm56, %v55, -inf
    %67 = vmax.xlane.f32.xlu0 %v66
    %v68 = vpop.xlane.xlu0 %67
    %v69 = vsub.f32 %v55, %v68
    %v70 = vmul.f32 %v69, 1.442695
    %v71 = vpow.pop %v70
    %v72 = vsel %vm56, %v71, 0.0
    %73 = vadd.xlane.f32.xlu0 %v72
    %v74 = vpop.xlane.xlu0 %73
    %v75 = vmul.f32 %v62, %v71
    %v76 = vsel %vm56, %v75, 0.0
    %77 = vadd.xlane.f32.xlu0 %v76
    %v78 = vpop.xlane.xlu0 %77
    %v79 = vmul.f32 %v65, %v74
    %v80 = vrcp.pop %v79
    %v81 = vmul.f32 %v78, %v80
    %v82 = vlog2.pop %v81
    %v83 = vmul.f32 %v82, 0.6931472
    %v84 = vmax.f32 %v83, -100.0
    %v85 = vsub.f32 0.0, %v84
    %v86 = vrcp.pop %v65
    %v87 = vmul.f32 1.0, %v86
    %v88 = vmul.f32 %v62, %v87
    %v89 = vld [vmem:[#allocation7] sm:$0xff]
    %v90 = vadd.f32 %v88, 0.0
    %v91 = vadd.f32 %v89, %v90
    %92 = vst.msk [vmem:[#allocation7] sm:$0xff] %vm56, %v91
    %v93 = vld [vmem:[%s3] sm:$0xff]
    %v94 = vadd.f32 %v85, 0.0
    %v95 = vadd.f32 %v93, %v94
    %vm96 = vcmask 7168
    %97 = vst.msk [vmem:[%s3] sm:$0xff] %vm96, %v95
    // Predicated region
    $region22: #{tpu_custom_call.1} parent=1 // pred_check
      _
    $region23: #{tpu_custom_call.1} parent=1 // pred_check_branch
      %99 = sbr.rel (0) target = $region25
    $region24: #{tpu_custom_call.1} parent=1 // pred_region
      %s101 = ssub.s32 128, 128
      %102 = vsyncadd [#allocation4], %s101
      %s104 = sshll.u32 [#allocation7], 4
      %s105 = int_to_ptr.vmem [resolvable:$true] %s104
      %107 = dma.vmem_to_hbm [thread:$0]  %s105, 128, %s2, [#allocation4]
    $region25: #{tpu_custom_call.1} parent=1 // pred_fallthru
      _
    // Predicated region
    $region26: #{tpu_custom_call.1} parent=1 // pred_check
      _
    $region27: #{tpu_custom_call.1} parent=1 // pred_check_branch
      %109 = sbr.rel (0) target = $region29
    $region28: #{tpu_custom_call.1} parent=1 // pred_region
      _
    $region29: #{tpu_custom_call.1} parent=1 // pred_fallthru
      _
    // Predicated region
    $region30: #{tpu_custom_call.1} parent=1 // pred_check
      _
    $region31: #{tpu_custom_call.1} parent=1 // pred_check_branch
      %111 = sbr.rel (0) target = $region33
    $region32: #{tpu_custom_call.1} parent=1 // pred_region
      %112 = dma.done [#allocation4], 128
    $region33: #{tpu_custom_call.1} parent=1 // pred_fallthru
      _
    // Predicated region
    $region34: #{tpu_custom_call.1} parent=1 // pred_check
      _
    $region35: #{tpu_custom_call.1} parent=1 // pred_check_branch
      %114 = sbr.rel (0) target = $region37
    $region36: #{tpu_custom_call.1} parent=1 // pred_region
      _
    $region37: #{tpu_custom_call.1} parent=1 // pred_fallthru
      _
    %115 = vsyncpa [#allocation3], 1
    %116 = vsyncpa [#allocation6], 1
    %117 = vsyncpa [#allocation4], 1

</llo_original>
